<compile_context>
chip_gen: v6e
topology: v6e:2x2x1
jax: 0.10.0
libtpu: 0.0.40
codegen_flags: <defaults>
</compile_context>

<pallas_src>
import functools
import math

import jax
import jax.numpy as jnp
from jax import lax
from jax.experimental import pallas as pl
from jax.experimental.pallas import tpu as pltpu


@functools.lru_cache(maxsize=None)
def _roll_matches_jnp_convention():
    """True iff pltpu.roll(x, s, axis)[i] == x[(i - s) % n] (jnp.roll semantics)."""
    def probe(x_ref, o_ref):
        o_ref[...] = pltpu.roll(x_ref[...], 1, axis=1)
    try:
        with jax.ensure_compile_time_eval():
            x = jnp.arange(8 * 128, dtype=jnp.float32).reshape(8, 128)
            out = pl.pallas_call(
                probe, out_shape=jax.ShapeDtypeStruct((8, 128), jnp.float32))(x)
            return bool(out[0, 0] == 127.0)
    except Exception:
        return True


def _make_entmax15_kernel(K, Kp, Lw, roll_fwd):
    """K: entmax length; Kp: next_pow2(K) (lane-group width); Lw: block lane
    width (= G * Kp, multiple of 128); roll_fwd: pltpu.roll sign convention."""
    log_kp = max(Kp.bit_length() - 1, 0)

    def roll_minus(v, d):   # value from lane (i - d) mod Lw
        return pltpu.roll(v, d if roll_fwd else Lw - d, axis=1)

    def roll_plus(v, d):    # value from lane (i + d) mod Lw
        return pltpu.roll(v, Lw - d if roll_fwd else d, axis=1)

    def kernel(x_ref, o_ref):
        x = x_ref[...].astype(jnp.float32)
        lane = lax.broadcasted_iota(jnp.int32, (1, Lw), 1)
        i_loc = lane & (Kp - 1)            # lane index within its Kp-wide group
        valid = i_loc < K                  # K may be < Kp (non-power-of-two K)

        # Pad lanes get -inf so they sort to the tail of their group and never
        # feed the prefix sums of real lanes.
        s = jnp.where(valid, x * 0.5, -jnp.inf)

        def partner(v, d):                 # v[i ^ d]; never crosses a group edge
            return jnp.where((i_loc & d) == 0, roll_plus(v, d), roll_minus(v, d))

        # ---- bitonic sort: descending within each Kp-lane group --------------
        for p in range(1, log_kp + 1):
            k_len = 1 << p
            for q in range(p - 1, -1, -1):
                d = 1 << q
                prt = partner(s, d)
                keep_min = ((i_loc & k_len) == 0) != ((i_loc & d) == 0)
                s = jnp.where(keep_min, jnp.minimum(s, prt), jnp.maximum(s, prt))

        # ---- segmented inclusive prefix sums (Hillis-Steele, exact f32) ------
        def seg_cumsum(v):
            for q in range(log_kp):
                d = 1 << q
                v = v + jnp.where(i_loc >= d, roll_minus(v, d), 0.0)
            return v

        # ---- segmented all-reduce sum (butterfly: every lane -> group sum) ---
        def seg_sum(v):
            for q in range(log_kp):
                v = v + partner(v, 1 << q)
            return v

        csum = seg_cumsum(s)
        csum_sq = seg_cumsum(s * s)
        rho = (i_loc + 1).astype(jnp.float32)
        inv_rho = 1.0 / rho
        mean = csum * inv_rho
        mean_sq = csum_sq * inv_rho
        # sqrt runs on the EUP slot; a slightly negative radicand past the
        # support boundary yields NaN exactly like torch (NaN <= s is False).
        tau = mean - jnp.sqrt((1.0 - rho * (mean_sq - mean * mean)) * inv_rho)

        support = seg_sum(jnp.where((tau <= s) & valid, 1.0, 0.0))
        tau_star = seg_sum(jnp.where(rho == support, tau, 0.0))
        # TODO(synk): fuse the two trailing butterflies into one pass if the
        # XLU ever becomes the binding slot on v6e/v7x (2 homogeneous XLUs).

        out = jnp.maximum(s - tau_star, 0.0)
        o_ref[...] = (out * out).astype(o_ref.dtype)

    return kernel


def _round_up(n, m):
    return ((n + m - 1) // m) * m


def _vmem_limit_bytes():
    cap = 64 * 1024 * 1024
    try:
        cap = int(getattr(pltpu.get_tpu_info(), "vmem_capacity_bytes", cap))
    except Exception:
        pass
    # ~40 MiB on 64 MiB/TC parts (v7x), 48 MiB on 128 MiB parts (v5e/v6e).
    return int(min(48 * 1024 * 1024, (cap * 5) // 8))


def _choose_tile_rows(rows, lane_width, itemsize, vmem_limit):
    # Sub-32-bit dtypes pack along sublanes: match the native tile height.
    mult = 8 if itemsize >= 4 else (16 if itemsize == 2 else 32)
    # ~24 live f32 (tile_r, Lw) temporaries + double-buffered in/out blocks.
    per_row = lane_width * (24 * 4 + 4 * itemsize)
    t = (vmem_limit // 2) // max(per_row, 1)
    t = (t // mult) * mult
    t = max(mult, min(512, t))
    rows_p = _round_up(rows, mult)
    t = min(t, rows_p)
    # Keep >= 2 grid steps when there is enough work (2 TensorCores on v7x).
    if rows_p > 2 * mult:
        t = min(t, _round_up((rows_p + 1) // 2, mult))
    return t


def entmax15_exact(x, dim=-1):
    """Pallas TPU implementation of ExactEntmax15.forward (result along `dim`
    is in descending-sorted order, exactly like the PyTorch reference)."""
    x = jnp.asarray(x)
    dim = dim % x.ndim

    # Move the entmax axis last, flatten the rest into rows.
    # TODO(synk): for dim != -1 this transpose is an extra HBM pass; it could be
    # folded into the BlockSpec by blocking the original (pre, K, post) layout.
    perm = [d for d in range(x.ndim) if d != dim] + [dim]
    xt = jnp.transpose(x, perm)
    lead_shape = xt.shape[:-1]
    K = xt.shape[-1]
    R = math.prod(lead_shape) if lead_shape else 1
    x2 = xt.reshape(R, K)

    # Lane layout: groups of Kp = next_pow2(K) lanes, packed so each block's
    # last dim is a multiple of 128 (lane-dense loads/stores for K < 128).
    Kp = 1 if K <= 1 else 1 << (K - 1).bit_length()
    if Kp != K:
        # TODO(synk): non-power-of-two K pays one extra pad pass through HBM.
        x2 = jnp.pad(x2, ((0, 0), (0, Kp - K)))
    G = max(1, 128 // Kp)
    Lw = G * Kp
    Rg = -(-R // G)
    if Rg * G != R:
        x2 = jnp.pad(x2, ((0, Rg * G - R), (0, 0)))
    x3 = x2.reshape(Rg, Lw)            # free reshape: G rows share one packed row

    vmem_limit = _vmem_limit_bytes()
    itemsize = jnp.dtype(x.dtype).itemsize
    tile_r = _choose_tile_rows(Rg, Lw, itemsize, vmem_limit)
    Rp = _round_up(Rg, tile_r)
    if Rp != Rg:
        x3 = jnp.pad(x3, ((0, Rp - Rg), (0, 0)))   # pad rows -> valid, discarded

    kernel = _make_entmax15_kernel(K, Kp, Lw, _roll_matches_jnp_convention())
    out = pl.pallas_call(
        kernel,
        out_shape=jax.ShapeDtypeStruct((Rp, Lw), x.dtype),
        grid=(Rp // tile_r,),
        in_specs=[pl.BlockSpec((tile_r, Lw), lambda i: (i, 0))],
        out_specs=pl.BlockSpec((tile_r, Lw), lambda i: (i, 0)),
        compiler_params=pltpu.CompilerParams(
            dimension_semantics=("parallel",),
            vmem_limit_bytes=vmem_limit),
    )(x3)

    out = out[:Rg].reshape(Rg * G, Kp)[:R, :K].reshape(lead_shape + (K,))
    inv_perm = [0] * x.ndim
    for a, p in enumerate(perm):
        inv_perm[p] = a
    return jnp.transpose(out, inv_perm)


def _entmax15_exact_ref(x, dim=-1):
    """Pure-JAX reference mirroring the PyTorch forward exactly."""
    x = jnp.asarray(x)
    K = x.shape[dim]
    s = -jnp.sort(-x.astype(jnp.float32), axis=dim) / 2.0     # descending sort
    view = [1] * x.ndim
    view[0] = -1
    rho = jnp.arange(1, K + 1, dtype=jnp.float32).reshape(view)
    rho = jnp.swapaxes(rho, 0, dim)
    mean = jnp.cumsum(s, axis=dim) / rho
    mean_sq = jnp.cumsum(s ** 2, axis=dim) / rho
    tau = mean - jnp.sqrt((1.0 - rho * (mean_sq - mean ** 2)) / rho)
    support = jnp.sum((tau <= s), axis=dim, keepdims=True)
    tau_star = jnp.take_along_axis(tau, support - 1, axis=dim)
    return (jnp.maximum(s - tau_star, 0.0) ** 2).astype(x.dtype)


if __name__ == "__main__":
    key = jax.random.PRNGKey(0)
    x = jax.random.normal(key, (2, 4, 16, 16), dtype=jnp.float32)

    y = jax.block_until_ready(entmax15_exact(x, dim=-1))
    y_ref = _entmax15_exact_ref(x, dim=-1)
    assert y.shape == x.shape and y.dtype == x.dtype
    assert jnp.allclose(y, y_ref, atol=1e-5, rtol=1e-5)
    assert jnp.allclose(jnp.sum(y, axis=-1), 1.0, atol=1e-4)

    # Row count not a multiple of the lane-packing / tile -> row padding path.
    x2 = jax.random.normal(jax.random.PRNGKey(1), (3, 5, 16), dtype=jnp.float32)
    y2 = jax.block_until_ready(entmax15_exact(x2, dim=-1))
    assert jnp.allclose(y2, _entmax15_exact_ref(x2, dim=-1), atol=1e-5, rtol=1e-5)

    # Non-power-of-two K -> lane padding inside the Kp-wide groups.
    x3 = jax.random.normal(jax.random.PRNGKey(2), (2, 7, 20), dtype=jnp.float32)
    y3 = jax.block_until_ready(entmax15_exact(x3, dim=-1))
    assert jnp.allclose(y3, _entmax15_exact_ref(x3, dim=-1), atol=1e-5, rtol=1e-5)

    # Non-default dim.
    x4 = jax.random.normal(jax.random.PRNGKey(3), (2, 16, 3), dtype=jnp.float32)
    y4 = jax.block_until_ready(entmax15_exact(x4, dim=1))
    assert jnp.allclose(y4, _entmax15_exact_ref(x4, dim=1), atol=1e-5, rtol=1e-5)

    print("KERNEL_OK")
</pallas_src>

<mosaic_0001>
module attributes {stable_mosaic.version = 11 : i64} {
  func.func @probe(%arg0: memref<8x128xf32, #tpu.memory_space<vmem>>, %arg1: memref<8x128xf32, #tpu.memory_space<vmem>>) attributes {dimension_semantics = [], scalar_prefetch = 0 : i64, scratch_operands = 0 : i64, tpu.core_type = #tpu.core_type<tc>} {
    %c0 = arith.constant 0 : index
    %c0_0 = arith.constant 0 : index
    %0 = vector.load %arg0[%c0, %c0_0] : memref<8x128xf32, #tpu.memory_space<vmem>>, vector<8x128xf32>
    %c1_i32 = arith.constant 1 : i32
    %1 = tpu.dynamic_rotate %0 by %c1_i32 dim 1 : vector<8x128xf32>, i32 -> vector<8x128xf32>
    %c0_1 = arith.constant 0 : index
    %c0_2 = arith.constant 0 : index
    %2 = vector.load %arg1[%c0_1, %c0_2] : memref<8x128xf32, #tpu.memory_space<vmem>>, vector<8x128xf32>
    tpu.vector_store %arg1[%c0_1, %c0_2], %1 {strides = array<i32>} : memref<8x128xf32, #tpu.memory_space<vmem>>, vector<8x128xf32>,
    return
  }
}

module attributes {stable_mosaic.version = 11 : i64} {
  func.func @kernel(%arg0: i32, %arg1: memref<16x128xf32, #tpu.memory_space<vmem>>, %arg2: memref<16x128xf32, #tpu.memory_space<vmem>>) attributes {dimension_semantics = [#tpu.dimension_semantics<parallel>], iteration_bounds = array<i64: 1>, scalar_prefetch = 0 : i64, scratch_operands = 0 : i64, tpu.core_type = #tpu.core_type<tc>, window_params = [{transform_indices = @transform_0, window_bounds = array<i64: 16, 128>}, {transform_indices = @transform_1, window_bounds = array<i64: 16, 128>}]} {
    %c0 = arith.constant 0 : index
    %c0_0 = arith.constant 0 : index
    %0 = vector.load %arg1[%c0, %c0_0] : memref<16x128xf32, #tpu.memory_space<vmem>>, vector<16x128xf32>
    %1 = tpu.iota {dimensions = array<i32: 1>} : vector<1x128xi32>
    %c15_i32 = arith.constant 15 : i32
    %2 = vector.broadcast %c15_i32 : i32 to vector<1x128xi32>
    %3 = arith.andi %1, %2 : vector<1x128xi32>
    %c16_i32 = arith.constant 16 : i32
    %4 = vector.broadcast %c16_i32 : i32 to vector<1x128xi32>
    %5 = arith.cmpi slt, %3, %4 : vector<1x128xi32>
    %cst = arith.constant 5.000000e-01 : f32
    %6 = vector.broadcast %cst : f32 to vector<16x128xf32>
    %7 = arith.mulf %0, %6 : vector<16x128xf32>
    %cst_1 = arith.constant 0xFF800000 : f32
    %8 = vector.shape_cast %5 : vector<1x128xi1> to vector<1x128xi1>
    %9 = vector.broadcast %8 : vector<1x128xi1> to vector<16x128xi1>
    %10 = vector.broadcast %cst_1 : f32 to vector<16x128xf32>
    %11 = arith.select %9, %7, %10 : vector<16x128xi1>, vector<16x128xf32>
    %c1_i32 = arith.constant 1 : i32
    %12 = vector.broadcast %c1_i32 : i32 to vector<1x128xi32>
    %13 = arith.andi %3, %12 : vector<1x128xi32>
    %c0_i32 = arith.constant 0 : i32
    %14 = vector.broadcast %c0_i32 : i32 to vector<1x128xi32>
    %15 = arith.cmpi eq, %13, %14 : vector<1x128xi32>
    %c127_i32 = arith.constant 127 : i32
    %16 = tpu.dynamic_rotate %11 by %c127_i32 dim 1 : vector<16x128xf32>, i32 -> vector<16x128xf32>
    %c1_i32_2 = arith.constant 1 : i32
    %17 = tpu.dynamic_rotate %11 by %c1_i32_2 dim 1 : vector<16x128xf32>, i32 -> vector<16x128xf32>
    %18 = vector.shape_cast %15 : vector<1x128xi1> to vector<1x128xi1>
    %19 = vector.broadcast %18 : vector<1x128xi1> to vector<16x128xi1>
    %20 = arith.select %19, %16, %17 : vector<16x128xi1>, vector<16x128xf32>
    %c2_i32 = arith.constant 2 : i32
    %21 = vector.broadcast %c2_i32 : i32 to vector<1x128xi32>
    %22 = arith.andi %3, %21 : vector<1x128xi32>
    %c0_i32_3 = arith.constant 0 : i32
    %23 = vector.broadcast %c0_i32_3 : i32 to vector<1x128xi32>
    %24 = arith.cmpi eq, %22, %23 : vector<1x128xi32>
    %c1_i32_4 = arith.constant 1 : i32
    %25 = vector.broadcast %c1_i32_4 : i32 to vector<1x128xi32>
    %26 = arith.andi %3, %25 : vector<1x128xi32>
    %c0_i32_5 = arith.constant 0 : i32
    %27 = vector.broadcast %c0_i32_5 : i32 to vector<1x128xi32>
    %28 = arith.cmpi eq, %26, %27 : vector<1x128xi32>
    %29 = arith.xori %24, %28 : vector<1x128xi1>
    %30 = arith.minimumf %11, %20 : vector<16x128xf32>
    %31 = arith.maximumf %11, %20 : vector<16x128xf32>
    %32 = vector.shape_cast %29 : vector<1x128xi1> to vector<1x128xi1>
    %33 = vector.broadcast %32 : vector<1x128xi1> to vector<16x128xi1>
    %34 = arith.select %33, %30, %31 : vector<16x128xi1>, vector<16x128xf32>
    %c2_i32_6 = arith.constant 2 : i32
    %35 = vector.broadcast %c2_i32_6 : i32 to vector<1x128xi32>
    %36 = arith.andi %3, %35 : vector<1x128xi32>
    %c0_i32_7 = arith.constant 0 : i32
    %37 = vector.broadcast %c0_i32_7 : i32 to vector<1x128xi32>
    %38 = arith.cmpi eq, %36, %37 : vector<1x128xi32>
    %c126_i32 = arith.constant 126 : i32
    %39 = tpu.dynamic_rotate %34 by %c126_i32 dim 1 : vector<16x128xf32>, i32 -> vector<16x128xf32>
    %c2_i32_8 = arith.constant 2 : i32
    %40 = tpu.dynamic_rotate %34 by %c2_i32_8 dim 1 : vector<16x128xf32>, i32 -> vector<16x128xf32>
    %41 = vector.shape_cast %38 : vector<1x128xi1> to vector<1x128xi1>
    %42 = vector.broadcast %41 : vector<1x128xi1> to vector<16x128xi1>
    %43 = arith.select %42, %39, %40 : vector<16x128xi1>, vector<16x128xf32>
    %c4_i32 = arith.constant 4 : i32
    %44 = vector.broadcast %c4_i32 : i32 to vector<1x128xi32>
    %45 = arith.andi %3, %44 : vector<1x128xi32>
    %c0_i32_9 = arith.constant 0 : i32
    %46 = vector.broadcast %c0_i32_9 : i32 to vector<1x128xi32>
    %47 = arith.cmpi eq, %45, %46 : vector<1x128xi32>
    %c2_i32_10 = arith.constant 2 : i32
    %48 = vector.broadcast %c2_i32_10 : i32 to vector<1x128xi32>
    %49 = arith.andi %3, %48 : vector<1x128xi32>
    %c0_i32_11 = arith.constant 0 : i32
    %50 = vector.broadcast %c0_i32_11 : i32 to vector<1x128xi32>
    %51 = arith.cmpi eq, %49, %50 : vector<1x128xi32>
    %52 = arith.xori %47, %51 : vector<1x128xi1>
    %53 = arith.minimumf %34, %43 : vector<16x128xf32>
    %54 = arith.maximumf %34, %43 : vector<16x128xf32>
    %55 = vector.shape_cast %52 : vector<1x128xi1> to vector<1x128xi1>
    %56 = vector.broadcast %55 : vector<1x128xi1> to vector<16x128xi1>
    %57 = arith.select %56, %53, %54 : vector<16x128xi1>, vector<16x128xf32>
    %c1_i32_12 = arith.constant 1 : i32
    %58 = vector.broadcast %c1_i32_12 : i32 to vector<1x128xi32>
    %59 = arith.andi %3, %58 : vector<1x128xi32>
    %c0_i32_13 = arith.constant 0 : i32
    %60 = vector.broadcast %c0_i32_13 : i32 to vector<1x128xi32>
    %61 = arith.cmpi eq, %59, %60 : vector<1x128xi32>
    %c127_i32_14 = arith.constant 127 : i32
    %62 = tpu.dynamic_rotate %57 by %c127_i32_14 dim 1 : vector<16x128xf32>, i32 -> vector<16x128xf32>
    %c1_i32_15 = arith.constant 1 : i32
    %63 = tpu.dynamic_rotate %57 by %c1_i32_15 dim 1 : vector<16x128xf32>, i32 -> vector<16x128xf32>
    %64 = vector.shape_cast %61 : vector<1x128xi1> to vector<1x128xi1>
    %65 = vector.broadcast %64 : vector<1x128xi1> to vector<16x128xi1>
    %66 = arith.select %65, %62, %63 : vector<16x128xi1>, vector<16x128xf32>
    %c4_i32_16 = arith.constant 4 : i32
    %67 = vector.broadcast %c4_i32_16 : i32 to vector<1x128xi32>
    %68 = arith.andi %3, %67 : vector<1x128xi32>
    %c0_i32_17 = arith.constant 0 : i32
    %69 = vector.broadcast %c0_i32_17 : i32 to vector<1x128xi32>
    %70 = arith.cmpi eq, %68, %69 : vector<1x128xi32>
    %c1_i32_18 = arith.constant 1 : i32
    %71 = vector.broadcast %c1_i32_18 : i32 to vector<1x128xi32>
    %72 = arith.andi %3, %71 : vector<1x128xi32>
    %c0_i32_19 = arith.constant 0 : i32
    %73 = vector.broadcast %c0_i32_19 : i32 to vector<1x128xi32>
    %74 = arith.cmpi eq, %72, %73 : vector<1x128xi32>
    %75 = arith.xori %70, %74 : vector<1x128xi1>
    %76 = arith.minimumf %57, %66 : vector<16x128xf32>
    %77 = arith.maximumf %57, %66 : vector<16x128xf32>
    %78 = vector.shape_cast %75 : vector<1x128xi1> to vector<1x128xi1>
    %79 = vector.broadcast %78 : vector<1x128xi1> to vector<16x128xi1>
    %80 = arith.select %79, %76, %77 : vector<16x128xi1>, vector<16x128xf32>
    %c4_i32_20 = arith.constant 4 : i32
    %81 = vector.broadcast %c4_i32_20 : i32 to vector<1x128xi32>
    %82 = arith.andi %3, %81 : vector<1x128xi32>
    %c0_i32_21 = arith.constant 0 : i32
    %83 = vector.broadcast %c0_i32_21 : i32 to vector<1x128xi32>
    %84 = arith.cmpi eq, %82, %83 : vector<1x128xi32>
    %c124_i32 = arith.constant 124 : i32
    %85 = tpu.dynamic_rotate %80 by %c124_i32 dim 1 : vector<16x128xf32>, i32 -> vector<16x128xf32>
    %c4_i32_22 = arith.constant 4 : i32
    %86 = tpu.dynamic_rotate %80 by %c4_i32_22 dim 1 : vector<16x128xf32>, i32 -> vector<16x128xf32>
    %87 = vector.shape_cast %84 : vector<1x128xi1> to vector<1x128xi1>
    %88 = vector.broadcast %87 : vector<1x128xi1> to vector<16x128xi1>
    %89 = arith.select %88, %85, %86 : vector<16x128xi1>, vector<16x128xf32>
    %c8_i32 = arith.constant 8 : i32
    %90 = vector.broadcast %c8_i32 : i32 to vector<1x128xi32>
    %91 = arith.andi %3, %90 : vector<1x128xi32>
    %c0_i32_23 = arith.constant 0 : i32
    %92 = vector.broadcast %c0_i32_23 : i32 to vector<1x128xi32>
    %93 = arith.cmpi eq, %91, %92 : vector<1x128xi32>
    %c4_i32_24 = arith.constant 4 : i32
    %94 = vector.broadcast %c4_i32_24 : i32 to vector<1x128xi32>
    %95 = arith.andi %3, %94 : vector<1x128xi32>
    %c0_i32_25 = arith.constant 0 : i32
    %96 = vector.broadcast %c0_i32_25 : i32 to vector<1x128xi32>
    %97 = arith.cmpi eq, %95, %96 : vector<1x128xi32>
    %98 = arith.xori %93, %97 : vector<1x128xi1>
    %99 = arith.minimumf %80, %89 : vector<16x128xf32>
    %100 = arith.maximumf %80, %89 : vector<16x128xf32>
    %101 = vector.shape_cast %98 : vector<1x128xi1> to vector<1x128xi1>
    %102 = vector.broadcast %101 : vector<1x128xi1> to vector<16x128xi1>
    %103 = arith.select %102, %99, %100 : vector<16x128xi1>, vector<16x128xf32>
    %c2_i32_26 = arith.constant 2 : i32
    %104 = vector.broadcast %c2_i32_26 : i32 to vector<1x128xi32>
    %105 = arith.andi %3, %104 : vector<1x128xi32>
    %c0_i32_27 = arith.constant 0 : i32
    %106 = vector.broadcast %c0_i32_27 : i32 to vector<1x128xi32>
    %107 = arith.cmpi eq, %105, %106 : vector<1x128xi32>
    %c126_i32_28 = arith.constant 126 : i32
    %108 = tpu.dynamic_rotate %103 by %c126_i32_28 dim 1 : vector<16x128xf32>, i32 -> vector<16x128xf32>
    %c2_i32_29 = arith.constant 2 : i32
    %109 = tpu.dynamic_rotate %103 by %c2_i32_29 dim 1 : vector<16x128xf32>, i32 -> vector<16x128xf32>
    %110 = vector.shape_cast %107 : vector<1x128xi1> to vector<1x128xi1>
    %111 = vector.broadcast %110 : vector<1x128xi1> to vector<16x128xi1>
    %112 = arith.select %111, %108, %109 : vector<16x128xi1>, vector<16x128xf32>
    %c8_i32_30 = arith.constant 8 : i32
    %113 = vector.broadcast %c8_i32_30 : i32 to vector<1x128xi32>
    %114 = arith.andi %3, %113 : vector<1x128xi32>
    %c0_i32_31 = arith.constant 0 : i32
    %115 = vector.broadcast %c0_i32_31 : i32 to vector<1x128xi32>
    %116 = arith.cmpi eq, %114, %115 : vector<1x128xi32>
    %c2_i32_32 = arith.constant 2 : i32
    %117 = vector.broadcast %c2_i32_32 : i32 to vector<1x128xi32>
    %118 = arith.andi %3, %117 : vector<1x128xi32>
    %c0_i32_33 = arith.constant 0 : i32
    %119 = vector.broadcast %c0_i32_33 : i32 to vector<1x128xi32>
    %120 = arith.cmpi eq, %118, %119 : vector<1x128xi32>
    %121 = arith.xori %116, %120 : vector<1x128xi1>
    %122 = arith.minimumf %103, %112 : vector<16x128xf32>
    %123 = arith.maximumf %103, %112 : vector<16x128xf32>
    %124 = vector.shape_cast %121 : vector<1x128xi1> to vector<1x128xi1>
    %125 = vector.broadcast %124 : vector<1x128xi1> to vector<16x128xi1>
    %126 = arith.select %125, %122, %123 : vector<16x128xi1>, vector<16x128xf32>
    %c1_i32_34 = arith.constant 1 : i32
    %127 = vector.broadcast %c1_i32_34 : i32 to vector<1x128xi32>
    %128 = arith.andi %3, %127 : vector<1x128xi32>
    %c0_i32_35 = arith.constant 0 : i32
    %129 = vector.broadcast %c0_i32_35 : i32 to vector<1x128xi32>
    %130 = arith.cmpi eq, %128, %129 : vector<1x128xi32>
    %c127_i32_36 = arith.constant 127 : i32
    %131 = tpu.dynamic_rotate %126 by %c127_i32_36 dim 1 : vector<16x128xf32>, i32 -> vector<16x128xf32>
    %c1_i32_37 = arith.constant 1 : i32
    %132 = tpu.dynamic_rotate %126 by %c1_i32_37 dim 1 : vector<16x128xf32>, i32 -> vector<16x128xf32>
    %133 = vector.shape_cast %130 : vector<1x128xi1> to vector<1x128xi1>
    %134 = vector.broadcast %133 : vector<1x128xi1> to vector<16x128xi1>
    %135 = arith.select %134, %131, %132 : vector<16x128xi1>, vector<16x128xf32>
    %c8_i32_38 = arith.constant 8 : i32
    %136 = vector.broadcast %c8_i32_38 : i32 to vector<1x128xi32>
    %137 = arith.andi %3, %136 : vector<1x128xi32>
    %c0_i32_39 = arith.constant 0 : i32
    %138 = vector.broadcast %c0_i32_39 : i32 to vector<1x128xi32>
    %139 = arith.cmpi eq, %137, %138 : vector<1x128xi32>
    %c1_i32_40 = arith.constant 1 : i32
    %140 = vector.broadcast %c1_i32_40 : i32 to vector<1x128xi32>
    %141 = arith.andi %3, %140 : vector<1x128xi32>
    %c0_i32_41 = arith.constant 0 : i32
    %142 = vector.broadcast %c0_i32_41 : i32 to vector<1x128xi32>
    %143 = arith.cmpi eq, %141, %142 : vector<1x128xi32>
    %144 = arith.xori %139, %143 : vector<1x128xi1>
    %145 = arith.minimumf %126, %135 : vector<16x128xf32>
    %146 = arith.maximumf %126, %135 : vector<16x128xf32>
    %147 = vector.shape_cast %144 : vector<1x128xi1> to vector<1x128xi1>
    %148 = vector.broadcast %147 : vector<1x128xi1> to vector<16x128xi1>
    %149 = arith.select %148, %145, %146 : vector<16x128xi1>, vector<16x128xf32>
    %c8_i32_42 = arith.constant 8 : i32
    %150 = vector.broadcast %c8_i32_42 : i32 to vector<1x128xi32>
    %151 = arith.andi %3, %150 : vector<1x128xi32>
    %c0_i32_43 = arith.constant 0 : i32
    %152 = vector.broadcast %c0_i32_43 : i32 to vector<1x128xi32>
    %153 = arith.cmpi eq, %151, %152 : vector<1x128xi32>
    %c120_i32 = arith.constant 120 : i32
    %154 = tpu.dynamic_rotate %149 by %c120_i32 dim 1 : vector<16x128xf32>, i32 -> vector<16x128xf32>
    %c8_i32_44 = arith.constant 8 : i32
    %155 = tpu.dynamic_rotate %149 by %c8_i32_44 dim 1 : vector<16x128xf32>, i32 -> vector<16x128xf32>
    %156 = vector.shape_cast %153 : vector<1x128xi1> to vector<1x128xi1>
    %157 = vector.broadcast %156 : vector<1x128xi1> to vector<16x128xi1>
    %158 = arith.select %157, %154, %155 : vector<16x128xi1>, vector<16x128xf32>
    %c16_i32_45 = arith.constant 16 : i32
    %159 = vector.broadcast %c16_i32_45 : i32 to vector<1x128xi32>
    %160 = arith.andi %3, %159 : vector<1x128xi32>
    %c0_i32_46 = arith.constant 0 : i32
    %161 = vector.broadcast %c0_i32_46 : i32 to vector<1x128xi32>
    %162 = arith.cmpi eq, %160, %161 : vector<1x128xi32>
    %c8_i32_47 = arith.constant 8 : i32
    %163 = vector.broadcast %c8_i32_47 : i32 to vector<1x128xi32>
    %164 = arith.andi %3, %163 : vector<1x128xi32>
    %c0_i32_48 = arith.constant 0 : i32
    %165 = vector.broadcast %c0_i32_48 : i32 to vector<1x128xi32>
    %166 = arith.cmpi eq, %164, %165 : vector<1x128xi32>
    %167 = arith.xori %162, %166 : vector<1x128xi1>
    %168 = arith.minimumf %149, %158 : vector<16x128xf32>
    %169 = arith.maximumf %149, %158 : vector<16x128xf32>
    %170 = vector.shape_cast %167 : vector<1x128xi1> to vector<1x128xi1>
    %171 = vector.broadcast %170 : vector<1x128xi1> to vector<16x128xi1>
    %172 = arith.select %171, %168, %169 : vector<16x128xi1>, vector<16x128xf32>
    %c4_i32_49 = arith.constant 4 : i32
    %173 = vector.broadcast %c4_i32_49 : i32 to vector<1x128xi32>
    %174 = arith.andi %3, %173 : vector<1x128xi32>
    %c0_i32_50 = arith.constant 0 : i32
    %175 = vector.broadcast %c0_i32_50 : i32 to vector<1x128xi32>
    %176 = arith.cmpi eq, %174, %175 : vector<1x128xi32>
    %c124_i32_51 = arith.constant 124 : i32
    %177 = tpu.dynamic_rotate %172 by %c124_i32_51 dim 1 : vector<16x128xf32>, i32 -> vector<16x128xf32>
    %c4_i32_52 = arith.constant 4 : i32
    %178 = tpu.dynamic_rotate %172 by %c4_i32_52 dim 1 : vector<16x128xf32>, i32 -> vector<16x128xf32>
    %179 = vector.shape_cast %176 : vector<1x128xi1> to vector<1x128xi1>
    %180 = vector.broadcast %179 : vector<1x128xi1> to vector<16x128xi1>
    %181 = arith.select %180, %177, %178 : vector<16x128xi1>, vector<16x128xf32>
    %c16_i32_53 = arith.constant 16 : i32
    %182 = vector.broadcast %c16_i32_53 : i32 to vector<1x128xi32>
    %183 = arith.andi %3, %182 : vector<1x128xi32>
    %c0_i32_54 = arith.constant 0 : i32
    %184 = vector.broadcast %c0_i32_54 : i32 to vector<1x128xi32>
    %185 = arith.cmpi eq, %183, %184 : vector<1x128xi32>
    %c4_i32_55 = arith.constant 4 : i32
    %186 = vector.broadcast %c4_i32_55 : i32 to vector<1x128xi32>
    %187 = arith.andi %3, %186 : vector<1x128xi32>
    %c0_i32_56 = arith.constant 0 : i32
    %188 = vector.broadcast %c0_i32_56 : i32 to vector<1x128xi32>
    %189 = arith.cmpi eq, %187, %188 : vector<1x128xi32>
    %190 = arith.xori %185, %189 : vector<1x128xi1>
    %191 = arith.minimumf %172, %181 : vector<16x128xf32>
    %192 = arith.maximumf %172, %181 : vector<16x128xf32>
    %193 = vector.shape_cast %190 : vector<1x128xi1> to vector<1x128xi1>
    %194 = vector.broadcast %193 : vector<1x128xi1> to vector<16x128xi1>
    %195 = arith.select %194, %191, %192 : vector<16x128xi1>, vector<16x128xf32>
    %c2_i32_57 = arith.constant 2 : i32
    %196 = vector.broadcast %c2_i32_57 : i32 to vector<1x128xi32>
    %197 = arith.andi %3, %196 : vector<1x128xi32>
    %c0_i32_58 = arith.constant 0 : i32
    %198 = vector.broadcast %c0_i32_58 : i32 to vector<1x128xi32>
    %199 = arith.cmpi eq, %197, %198 : vector<1x128xi32>
    %c126_i32_59 = arith.constant 126 : i32
    %200 = tpu.dynamic_rotate %195 by %c126_i32_59 dim 1 : vector<16x128xf32>, i32 -> vector<16x128xf32>
    %c2_i32_60 = arith.constant 2 : i32
    %201 = tpu.dynamic_rotate %195 by %c2_i32_60 dim 1 : vector<16x128xf32>, i32 -> vector<16x128xf32>
    %202 = vector.shape_cast %199 : vector<1x128xi1> to vector<1x128xi1>
    %203 = vector.broadcast %202 : vector<1x128xi1> to vector<16x128xi1>
    %204 = arith.select %203, %200, %201 : vector<16x128xi1>, vector<16x128xf32>
    %c16_i32_61 = arith.constant 16 : i32
    %205 = vector.broadcast %c16_i32_61 : i32 to vector<1x128xi32>
    %206 = arith.andi %3, %205 : vector<1x128xi32>
    %c0_i32_62 = arith.constant 0 : i32
    %207 = vector.broadcast %c0_i32_62 : i32 to vector<1x128xi32>
    %208 = arith.cmpi eq, %206, %207 : vector<1x128xi32>
    %c2_i32_63 = arith.constant 2 : i32
    %209 = vector.broadcast %c2_i32_63 : i32 to vector<1x128xi32>
    %210 = arith.andi %3, %209 : vector<1x128xi32>
    %c0_i32_64 = arith.constant 0 : i32
    %211 = vector.broadcast %c0_i32_64 : i32 to vector<1x128xi32>
    %212 = arith.cmpi eq, %210, %211 : vector<1x128xi32>
    %213 = arith.xori %208, %212 : vector<1x128xi1>
    %214 = arith.minimumf %195, %204 : vector<16x128xf32>
    %215 = arith.maximumf %195, %204 : vector<16x128xf32>
    %216 = vector.shape_cast %213 : vector<1x128xi1> to vector<1x128xi1>
    %217 = vector.broadcast %216 : vector<1x128xi1> to vector<16x128xi1>
    %218 = arith.select %217, %214, %215 : vector<16x128xi1>, vector<16x128xf32>
    %c1_i32_65 = arith.constant 1 : i32
    %219 = vector.broadcast %c1_i32_65 : i32 to vector<1x128xi32>
    %220 = arith.andi %3, %219 : vector<1x128xi32>
    %c0_i32_66 = arith.constant 0 : i32
    %221 = vector.broadcast %c0_i32_66 : i32 to vector<1x128xi32>
    %222 = arith.cmpi eq, %220, %221 : vector<1x128xi32>
    %c127_i32_67 = arith.constant 127 : i32
    %223 = tpu.dynamic_rotate %218 by %c127_i32_67 dim 1 : vector<16x128xf32>, i32 -> vector<16x128xf32>
    %c1_i32_68 = arith.constant 1 : i32
    %224 = tpu.dynamic_rotate %218 by %c1_i32_68 dim 1 : vector<16x128xf32>, i32 -> vector<16x128xf32>
    %225 = vector.shape_cast %222 : vector<1x128xi1> to vector<1x128xi1>
    %226 = vector.broadcast %225 : vector<1x128xi1> to vector<16x128xi1>
    %227 = arith.select %226, %223, %224 : vector<16x128xi1>, vector<16x128xf32>
    %c16_i32_69 = arith.constant 16 : i32
    %228 = vector.broadcast %c16_i32_69 : i32 to vector<1x128xi32>
    %229 = arith.andi %3, %228 : vector<1x128xi32>
    %c0_i32_70 = arith.constant 0 : i32
    %230 = vector.broadcast %c0_i32_70 : i32 to vector<1x128xi32>
    %231 = arith.cmpi eq, %229, %230 : vector<1x128xi32>
    %c1_i32_71 = arith.constant 1 : i32
    %232 = vector.broadcast %c1_i32_71 : i32 to vector<1x128xi32>
    %233 = arith.andi %3, %232 : vector<1x128xi32>
    %c0_i32_72 = arith.constant 0 : i32
    %234 = vector.broadcast %c0_i32_72 : i32 to vector<1x128xi32>
    %235 = arith.cmpi eq, %233, %234 : vector<1x128xi32>
    %236 = arith.xori %231, %235 : vector<1x128xi1>
    %237 = arith.minimumf %218, %227 : vector<16x128xf32>
    %238 = arith.maximumf %218, %227 : vector<16x128xf32>
    %239 = vector.shape_cast %236 : vector<1x128xi1> to vector<1x128xi1>
    %240 = vector.broadcast %239 : vector<1x128xi1> to vector<16x128xi1>
    %241 = arith.select %240, %237, %238 : vector<16x128xi1>, vector<16x128xf32>
    %c1_i32_73 = arith.constant 1 : i32
    %242 = vector.broadcast %c1_i32_73 : i32 to vector<1x128xi32>
    %243 = arith.cmpi sge, %3, %242 : vector<1x128xi32>
    %c1_i32_74 = arith.constant 1 : i32
    %244 = tpu.dynamic_rotate %241 by %c1_i32_74 dim 1 : vector<16x128xf32>, i32 -> vector<16x128xf32>
    %cst_75 = arith.constant 0.000000e+00 : f32
    %245 = vector.shape_cast %243 : vector<1x128xi1> to vector<1x128xi1>
    %246 = vector.broadcast %245 : vector<1x128xi1> to vector<16x128xi1>
    %247 = vector.broadcast %cst_75 : f32 to vector<16x128xf32>
    %248 = arith.select %246, %244, %247 : vector<16x128xi1>, vector<16x128xf32>
    %249 = arith.addf %241, %248 : vector<16x128xf32>
    %c2_i32_76 = arith.constant 2 : i32
    %250 = vector.broadcast %c2_i32_76 : i32 to vector<1x128xi32>
    %251 = arith.cmpi sge, %3, %250 : vector<1x128xi32>
    %c2_i32_77 = arith.constant 2 : i32
    %252 = tpu.dynamic_rotate %249 by %c2_i32_77 dim 1 : vector<16x128xf32>, i32 -> vector<16x128xf32>
    %cst_78 = arith.constant 0.000000e+00 : f32
    %253 = vector.shape_cast %251 : vector<1x128xi1> to vector<1x128xi1>
    %254 = vector.broadcast %253 : vector<1x128xi1> to vector<16x128xi1>
    %255 = vector.broadcast %cst_78 : f32 to vector<16x128xf32>
    %256 = arith.select %254, %252, %255 : vector<16x128xi1>, vector<16x128xf32>
    %257 = arith.addf %249, %256 : vector<16x128xf32>
    %c4_i32_79 = arith.constant 4 : i32
    %258 = vector.broadcast %c4_i32_79 : i32 to vector<1x128xi32>
    %259 = arith.cmpi sge, %3, %258 : vector<1x128xi32>
    %c4_i32_80 = arith.constant 4 : i32
    %260 = tpu.dynamic_rotate %257 by %c4_i32_80 dim 1 : vector<16x128xf32>, i32 -> vector<16x128xf32>
    %cst_81 = arith.constant 0.000000e+00 : f32
    %261 = vector.shape_cast %259 : vector<1x128xi1> to vector<1x128xi1>
    %262 = vector.broadcast %261 : vector<1x128xi1> to vector<16x128xi1>
    %263 = vector.broadcast %cst_81 : f32 to vector<16x128xf32>
    %264 = arith.select %262, %260, %263 : vector<16x128xi1>, vector<16x128xf32>
    %265 = arith.addf %257, %264 : vector<16x128xf32>
    %c8_i32_82 = arith.constant 8 : i32
    %266 = vector.broadcast %c8_i32_82 : i32 to vector<1x128xi32>
    %267 = arith.cmpi sge, %3, %266 : vector<1x128xi32>
    %c8_i32_83 = arith.constant 8 : i32
    %268 = tpu.dynamic_rotate %265 by %c8_i32_83 dim 1 : vector<16x128xf32>, i32 -> vector<16x128xf32>
    %cst_84 = arith.constant 0.000000e+00 : f32
    %269 = vector.shape_cast %267 : vector<1x128xi1> to vector<1x128xi1>
    %270 = vector.broadcast %269 : vector<1x128xi1> to vector<16x128xi1>
    %271 = vector.broadcast %cst_84 : f32 to vector<16x128xf32>
    %272 = arith.select %270, %268, %271 : vector<16x128xi1>, vector<16x128xf32>
    %273 = arith.addf %265, %272 : vector<16x128xf32>
    %274 = arith.mulf %241, %241 : vector<16x128xf32>
    %c1_i32_85 = arith.constant 1 : i32
    %275 = vector.broadcast %c1_i32_85 : i32 to vector<1x128xi32>
    %276 = arith.cmpi sge, %3, %275 : vector<1x128xi32>
    %c1_i32_86 = arith.constant 1 : i32
    %277 = tpu.dynamic_rotate %274 by %c1_i32_86 dim 1 : vector<16x128xf32>, i32 -> vector<16x128xf32>
    %cst_87 = arith.constant 0.000000e+00 : f32
    %278 = vector.shape_cast %276 : vector<1x128xi1> to vector<1x128xi1>
    %279 = vector.broadcast %278 : vector<1x128xi1> to vector<16x128xi1>
    %280 = vector.broadcast %cst_87 : f32 to vector<16x128xf32>
    %281 = arith.select %279, %277, %280 : vector<16x128xi1>, vector<16x128xf32>
    %282 = arith.addf %274, %281 : vector<16x128xf32>
    %c2_i32_88 = arith.constant 2 : i32
    %283 = vector.broadcast %c2_i32_88 : i32 to vector<1x128xi32>
    %284 = arith.cmpi sge, %3, %283 : vector<1x128xi32>
    %c2_i32_89 = arith.constant 2 : i32
    %285 = tpu.dynamic_rotate %282 by %c2_i32_89 dim 1 : vector<16x128xf32>, i32 -> vector<16x128xf32>
    %cst_90 = arith.constant 0.000000e+00 : f32
    %286 = vector.shape_cast %284 : vector<1x128xi1> to vector<1x128xi1>
    %287 = vector.broadcast %286 : vector<1x128xi1> to vector<16x128xi1>
    %288 = vector.broadcast %cst_90 : f32 to vector<16x128xf32>
    %289 = arith.select %287, %285, %288 : vector<16x128xi1>, vector<16x128xf32>
    %290 = arith.addf %282, %289 : vector<16x128xf32>
    %c4_i32_91 = arith.constant 4 : i32
    %291 = vector.broadcast %c4_i32_91 : i32 to vector<1x128xi32>
    %292 = arith.cmpi sge, %3, %291 : vector<1x128xi32>
    %c4_i32_92 = arith.constant 4 : i32
    %293 = tpu.dynamic_rotate %290 by %c4_i32_92 dim 1 : vector<16x128xf32>, i32 -> vector<16x128xf32>
    %cst_93 = arith.constant 0.000000e+00 : f32
    %294 = vector.shape_cast %292 : vector<1x128xi1> to vector<1x128xi1>
    %295 = vector.broadcast %294 : vector<1x128xi1> to vector<16x128xi1>
    %296 = vector.broadcast %cst_93 : f32 to vector<16x128xf32>
    %297 = arith.select %295, %293, %296 : vector<16x128xi1>, vector<16x128xf32>
    %298 = arith.addf %290, %297 : vector<16x128xf32>
    %c8_i32_94 = arith.constant 8 : i32
    %299 = vector.broadcast %c8_i32_94 : i32 to vector<1x128xi32>
    %300 = arith.cmpi sge, %3, %299 : vector<1x128xi32>
    %c8_i32_95 = arith.constant 8 : i32
    %301 = tpu.dynamic_rotate %298 by %c8_i32_95 dim 1 : vector<16x128xf32>, i32 -> vector<16x128xf32>
    %cst_96 = arith.constant 0.000000e+00 : f32
    %302 = vector.shape_cast %300 : vector<1x128xi1> to vector<1x128xi1>
    %303 = vector.broadcast %302 : vector<1x128xi1> to vector<16x128xi1>
    %304 = vector.broadcast %cst_96 : f32 to vector<16x128xf32>
    %305 = arith.select %303, %301, %304 : vector<16x128xi1>, vector<16x128xf32>
    %306 = arith.addf %298, %305 : vector<16x128xf32>
    %c1_i32_97 = arith.constant 1 : i32
    %307 = vector.broadcast %c1_i32_97 : i32 to vector<1x128xi32>
    %308 = arith.addi %3, %307 : vector<1x128xi32>
    %309 = arith.sitofp %308 : vector<1x128xi32> to vector<1x128xf32>
    %cst_98 = arith.constant 1.000000e+00 : f32
    %310 = vector.broadcast %cst_98 : f32 to vector<1x128xf32>
    %311 = arith.divf %310, %309 : vector<1x128xf32>
    %312 = vector.broadcast %311 : vector<1x128xf32> to vector<16x128xf32>
    %313 = arith.mulf %273, %312 : vector<16x128xf32>
    %314 = vector.broadcast %311 : vector<1x128xf32> to vector<16x128xf32>
    %315 = arith.mulf %306, %314 : vector<16x128xf32>
    %316 = arith.mulf %313, %313 : vector<16x128xf32>
    %317 = arith.subf %315, %316 : vector<16x128xf32>
    %318 = vector.broadcast %309 : vector<1x128xf32> to vector<16x128xf32>
    %319 = arith.mulf %318, %317 : vector<16x128xf32>
    %cst_99 = arith.constant 1.000000e+00 : f32
    %320 = vector.broadcast %cst_99 : f32 to vector<16x128xf32>
    %321 = arith.subf %320, %319 : vector<16x128xf32>
    %322 = vector.broadcast %311 : vector<1x128xf32> to vector<16x128xf32>
    %323 = arith.mulf %321, %322 : vector<16x128xf32>
    %324 = math.sqrt %323 : vector<16x128xf32>
    %325 = arith.subf %313, %324 : vector<16x128xf32>
    %326 = arith.cmpf ole, %325, %241 : vector<16x128xf32>
    %327 = vector.broadcast %5 : vector<1x128xi1> to vector<16x128xi1>
    %328 = arith.andi %326, %327 : vector<16x128xi1>
    %cst_100 = arith.constant 1.000000e+00 : f32
    %cst_101 = arith.constant 0.000000e+00 : f32
    %329 = vector.broadcast %cst_100 : f32 to vector<16x128xf32>
    %330 = vector.broadcast %cst_101 : f32 to vector<16x128xf32>
    %331 = arith.select %328, %329, %330 : vector<16x128xi1>, vector<16x128xf32>
    %c1_i32_102 = arith.constant 1 : i32
    %332 = vector.broadcast %c1_i32_102 : i32 to vector<1x128xi32>
    %333 = arith.andi %3, %332 : vector<1x128xi32>
    %c0_i32_103 = arith.constant 0 : i32
    %334 = vector.broadcast %c0_i32_103 : i32 to vector<1x128xi32>
    %335 = arith.cmpi eq, %333, %334 : vector<1x128xi32>
    %c127_i32_104 = arith.constant 127 : i32
    %336 = tpu.dynamic_rotate %331 by %c127_i32_104 dim 1 : vector<16x128xf32>, i32 -> vector<16x128xf32>
    %c1_i32_105 = arith.constant 1 : i32
    %337 = tpu.dynamic_rotate %331 by %c1_i32_105 dim 1 : vector<16x128xf32>, i32 -> vector<16x128xf32>
    %338 = vector.shape_cast %335 : vector<1x128xi1> to vector<1x128xi1>
    %339 = vector.broadcast %338 : vector<1x128xi1> to vector<16x128xi1>
    %340 = arith.select %339, %336, %337 : vector<16x128xi1>, vector<16x128xf32>
    %341 = arith.addf %331, %340 : vector<16x128xf32>
    %c2_i32_106 = arith.constant 2 : i32
    %342 = vector.broadcast %c2_i32_106 : i32 to vector<1x128xi32>
    %343 = arith.andi %3, %342 : vector<1x128xi32>
    %c0_i32_107 = arith.constant 0 : i32
    %344 = vector.broadcast %c0_i32_107 : i32 to vector<1x128xi32>
    %345 = arith.cmpi eq, %343, %344 : vector<1x128xi32>
    %c126_i32_108 = arith.constant 126 : i32
    %346 = tpu.dynamic_rotate %341 by %c126_i32_108 dim 1 : vector<16x128xf32>, i32 -> vector<16x128xf32>
    %c2_i32_109 = arith.constant 2 : i32
    %347 = tpu.dynamic_rotate %341 by %c2_i32_109 dim 1 : vector<16x128xf32>, i32 -> vector<16x128xf32>
    %348 = vector.shape_cast %345 : vector<1x128xi1> to vector<1x128xi1>
    %349 = vector.broadcast %348 : vector<1x128xi1> to vector<16x128xi1>
    %350 = arith.select %349, %346, %347 : vector<16x128xi1>, vector<16x128xf32>
    %351 = arith.addf %341, %350 : vector<16x128xf32>
    %c4_i32_110 = arith.constant 4 : i32
    %352 = vector.broadcast %c4_i32_110 : i32 to vector<1x128xi32>
    %353 = arith.andi %3, %352 : vector<1x128xi32>
    %c0_i32_111 = arith.constant 0 : i32
    %354 = vector.broadcast %c0_i32_111 : i32 to vector<1x128xi32>
    %355 = arith.cmpi eq, %353, %354 : vector<1x128xi32>
    %c124_i32_112 = arith.constant 124 : i32
    %356 = tpu.dynamic_rotate %351 by %c124_i32_112 dim 1 : vector<16x128xf32>, i32 -> vector<16x128xf32>
    %c4_i32_113 = arith.constant 4 : i32
    %357 = tpu.dynamic_rotate %351 by %c4_i32_113 dim 1 : vector<16x128xf32>, i32 -> vector<16x128xf32>
    %358 = vector.shape_cast %355 : vector<1x128xi1> to vector<1x128xi1>
    %359 = vector.broadcast %358 : vector<1x128xi1> to vector<16x128xi1>
    %360 = arith.select %359, %356, %357 : vector<16x128xi1>, vector<16x128xf32>
    %361 = arith.addf %351, %360 : vector<16x128xf32>
    %c8_i32_114 = arith.constant 8 : i32
    %362 = vector.broadcast %c8_i32_114 : i32 to vector<1x128xi32>
    %363 = arith.andi %3, %362 : vector<1x128xi32>
    %c0_i32_115 = arith.constant 0 : i32
    %364 = vector.broadcast %c0_i32_115 : i32 to vector<1x128xi32>
    %365 = arith.cmpi eq, %363, %364 : vector<1x128xi32>
    %c120_i32_116 = arith.constant 120 : i32
    %366 = tpu.dynamic_rotate %361 by %c120_i32_116 dim 1 : vector<16x128xf32>, i32 -> vector<16x128xf32>
    %c8_i32_117 = arith.constant 8 : i32
    %367 = tpu.dynamic_rotate %361 by %c8_i32_117 dim 1 : vector<16x128xf32>, i32 -> vector<16x128xf32>
    %368 = vector.shape_cast %365 : vector<1x128xi1> to vector<1x128xi1>
    %369 = vector.broadcast %368 : vector<1x128xi1> to vector<16x128xi1>
    %370 = arith.select %369, %366, %367 : vector<16x128xi1>, vector<16x128xf32>
    %371 = arith.addf %361, %370 : vector<16x128xf32>
    %372 = vector.broadcast %309 : vector<1x128xf32> to vector<16x128xf32>
    %373 = arith.cmpf oeq, %372, %371 : vector<16x128xf32>
    %cst_118 = arith.constant 0.000000e+00 : f32
    %374 = vector.broadcast %cst_118 : f32 to vector<16x128xf32>
    %375 = arith.select %373, %325, %374 : vector<16x128xi1>, vector<16x128xf32>
    %c1_i32_119 = arith.constant 1 : i32
    %376 = vector.broadcast %c1_i32_119 : i32 to vector<1x128xi32>
    %377 = arith.andi %3, %376 : vector<1x128xi32>
    %c0_i32_120 = arith.constant 0 : i32
    %378 = vector.broadcast %c0_i32_120 : i32 to vector<1x128xi32>
    %379 = arith.cmpi eq, %377, %378 : vector<1x128xi32>
    %c127_i32_121 = arith.constant 127 : i32
    %380 = tpu.dynamic_rotate %375 by %c127_i32_121 dim 1 : vector<16x128xf32>, i32 -> vector<16x128xf32>
    %c1_i32_122 = arith.constant 1 : i32
    %381 = tpu.dynamic_rotate %375 by %c1_i32_122 dim 1 : vector<16x128xf32>, i32 -> vector<16x128xf32>
    %382 = vector.shape_cast %379 : vector<1x128xi1> to vector<1x128xi1>
    %383 = vector.broadcast %382 : vector<1x128xi1> to vector<16x128xi1>
    %384 = arith.select %383, %380, %381 : vector<16x128xi1>, vector<16x128xf32>
    %385 = arith.addf %375, %384 : vector<16x128xf32>
    %c2_i32_123 = arith.constant 2 : i32
    %386 = vector.broadcast %c2_i32_123 : i32 to vector<1x128xi32>
    %387 = arith.andi %3, %386 : vector<1x128xi32>
    %c0_i32_124 = arith.constant 0 : i32
    %388 = vector.broadcast %c0_i32_124 : i32 to vector<1x128xi32>
    %389 = arith.cmpi eq, %387, %388 : vector<1x128xi32>
    %c126_i32_125 = arith.constant 126 : i32
    %390 = tpu.dynamic_rotate %385 by %c126_i32_125 dim 1 : vector<16x128xf32>, i32 -> vector<16x128xf32>
    %c2_i32_126 = arith.constant 2 : i32
    %391 = tpu.dynamic_rotate %385 by %c2_i32_126 dim 1 : vector<16x128xf32>, i32 -> vector<16x128xf32>
    %392 = vector.shape_cast %389 : vector<1x128xi1> to vector<1x128xi1>
    %393 = vector.broadcast %392 : vector<1x128xi1> to vector<16x128xi1>
    %394 = arith.select %393, %390, %391 : vector<16x128xi1>, vector<16x128xf32>
    %395 = arith.addf %385, %394 : vector<16x128xf32>
    %c4_i32_127 = arith.constant 4 : i32
    %396 = vector.broadcast %c4_i32_127 : i32 to vector<1x128xi32>
    %397 = arith.andi %3, %396 : vector<1x128xi32>
    %c0_i32_128 = arith.constant 0 : i32
    %398 = vector.broadcast %c0_i32_128 : i32 to vector<1x128xi32>
    %399 = arith.cmpi eq, %397, %398 : vector<1x128xi32>
    %c124_i32_129 = arith.constant 124 : i32
    %400 = tpu.dynamic_rotate %395 by %c124_i32_129 dim 1 : vector<16x128xf32>, i32 -> vector<16x128xf32>
    %c4_i32_130 = arith.constant 4 : i32
    %401 = tpu.dynamic_rotate %395 by %c4_i32_130 dim 1 : vector<16x128xf32>, i32 -> vector<16x128xf32>
    %402 = vector.shape_cast %399 : vector<1x128xi1> to vector<1x128xi1>
    %403 = vector.broadcast %402 : vector<1x128xi1> to vector<16x128xi1>
    %404 = arith.select %403, %400, %401 : vector<16x128xi1>, vector<16x128xf32>
    %405 = arith.addf %395, %404 : vector<16x128xf32>
    %c8_i32_131 = arith.constant 8 : i32
    %406 = vector.broadcast %c8_i32_131 : i32 to vector<1x128xi32>
    %407 = arith.andi %3, %406 : vector<1x128xi32>
    %c0_i32_132 = arith.constant 0 : i32
    %408 = vector.broadcast %c0_i32_132 : i32 to vector<1x128xi32>
    %409 = arith.cmpi eq, %407, %408 : vector<1x128xi32>
    %c120_i32_133 = arith.constant 120 : i32
    %410 = tpu.dynamic_rotate %405 by %c120_i32_133 dim 1 : vector<16x128xf32>, i32 -> vector<16x128xf32>
    %c8_i32_134 = arith.constant 8 : i32
    %411 = tpu.dynamic_rotate %405 by %c8_i32_134 dim 1 : vector<16x128xf32>, i32 -> vector<16x128xf32>
    %412 = vector.shape_cast %409 : vector<1x128xi1> to vector<1x128xi1>
    %413 = vector.broadcast %412 : vector<1x128xi1> to vector<16x128xi1>
    %414 = arith.select %413, %410, %411 : vector<16x128xi1>, vector<16x128xf32>
    %415 = arith.addf %405, %414 : vector<16x128xf32>
    %416 = arith.subf %241, %415 : vector<16x128xf32>
    %cst_135 = arith.constant 0.000000e+00 : f32
    %417 = vector.broadcast %cst_135 : f32 to vector<16x128xf32>
    %418 = arith.maximumf %416, %417 : vector<16x128xf32>
    %419 = arith.mulf %418, %418 : vector<16x128xf32>
    %c0_136 = arith.constant 0 : index
    %c0_137 = arith.constant 0 : index
    %420 = vector.load %arg2[%c0_136, %c0_137] : memref<16x128xf32, #tpu.memory_space<vmem>>, vector<16x128xf32>
    tpu.vector_store %arg2[%c0_136, %c0_137], %419 {strides = array<i32>} : memref<16x128xf32, #tpu.memory_space<vmem>>, vector<16x128xf32>,
    return
  }
  func.func @transform_0(%arg0: i32) -> (i32, i32) {
    %c0_i32 = arith.constant 0 : i32
    %c0_i32_0 = arith.constant 0 : i32
    return %arg0, %c0_i32 : i32, i32
  }
  func.func @transform_1(%arg0: i32) -> (i32, i32) {
    %c0_i32 = arith.constant 0 : i32
    %c0_i32_0 = arith.constant 0 : i32
    return %arg0, %c0_i32 : i32, i32
  }
}

</mosaic_0001>

<llo_original>
// kernel: tpu_custom_call.1
$region0: #{tpu_custom_call.1}
  #allocation0 [shape = 'u32[]', space=smem, size = 0x4, offset = 0x4, fixed_abs, tag = 'smem constant byte address 0x4 - core index']
  #allocation1 [shape = 'u32[144,128]{1,0:T(1,128)}', space=vmem, size = 0x12000, scoped, tag = 'internal scratch']
  %s0 = inlined_call_operand.hbm [shape: f32[8,128], index: 0, kind: input, shape index: {}]
  %s1 = inlined_call_operand.hbm [shape: f32[8,128], index: 1, kind: output, shape index: {}]
  %s2 = sld [smem:[#allocation0]]
  $region18: #{tpu_custom_call.1} parent=0
    _
  %s4 = ssub.s32 1, %s2
  %s5 = scalar_select 0, %s4, %s2
  $region1: #{tpu_custom_call.1} parent=0
    #allocation2 [shape = 'u8[4096]{0}', space=vmem, size = 0x1000, scoped, tag = 'input window, operand 0, single buffered']
    #allocation3 [shape = 's32[1]{0}', space=sflag, size = 0x4, scoped, tag = 'scoped memory for tpu_custom_call.1']
    #allocation4 [shape = 's32[1]{0}', space=sflag, size = 0x4, scoped, tag = 'scoped memory for tpu_custom_call.1']
    #allocation5 [shape = 'u8[4096]{0}', space=vmem, size = 0x1000, scoped, tag = 'output window, operand 0, single buffered']
    %6 = vsyncpa [#allocation3], 0
    %7 = vsyncpa [#allocation4], 0
    // Predicated region
    $region2: #{tpu_custom_call.1} parent=1 // pred_check
      _
    $region3: #{tpu_custom_call.1} parent=1 // pred_check_branch
      %9 = sbr.rel (0) target = $region5
    $region4: #{tpu_custom_call.1} parent=1 // pred_region
      %s11 = ssub.s32 128, 128
      %12 = vsyncadd [#allocation3], %s11
      %s14 = sshll.u32 [#allocation2], 4
      %s15 = int_to_ptr.vmem [resolvable:$true] %s14
      %17 = dma.hbm_to_vmem [thread:$0]  %s0, 128, %s15, [#allocation3]
    $region5: #{tpu_custom_call.1} parent=1 // pred_fallthru
      _
    // Predicated region
    $region6: #{tpu_custom_call.1} parent=1 // pred_check
      _
    $region7: #{tpu_custom_call.1} parent=1 // pred_check_branch
      %19 = sbr.rel (0) target = $region9
    $region8: #{tpu_custom_call.1} parent=1 // pred_region
      %20 = dma.done [#allocation3], 128
    $region9: #{tpu_custom_call.1} parent=1 // pred_fallthru
      _
    %v21 = vld [vmem:[#allocation2] sm:$0xff]
    %22 = vrot.lane.b32.xlu0 %v21, 1
    %v23 = vpop.permute.xlu0 %22
    %24 = vst [vmem:[#allocation5] sm:$0xff] %v23
    // Predicated region
    $region10: #{tpu_custom_call.1} parent=1 // pred_check
      _
    $region11: #{tpu_custom_call.1} parent=1 // pred_check_branch
      %26 = sbr.rel (0) target = $region13
    $region12: #{tpu_custom_call.1} parent=1 // pred_region
      %s28 = ssub.s32 128, 128
      %29 = vsyncadd [#allocation4], %s28
      %s31 = sshll.u32 [#allocation5], 4
      %s32 = int_to_ptr.vmem [resolvable:$true] %s31
      %34 = dma.vmem_to_hbm [thread:$0]  %s32, 128, %s1, [#allocation4]
    $region13: #{tpu_custom_call.1} parent=1 // pred_fallthru
      _
    // Predicated region
    $region14: #{tpu_custom_call.1} parent=1 // pred_check
      _
    $region15: #{tpu_custom_call.1} parent=1 // pred_check_branch
      %36 = sbr.rel (0) target = $region17
    $region16: #{tpu_custom_call.1} parent=1 // pred_region
      %37 = dma.done [#allocation4], 128
    $region17: #{tpu_custom_call.1} parent=1 // pred_fallthru
      _
    %38 = vsyncpa [#allocation3], 1
    %39 = vsyncpa [#allocation4], 1

// kernel: tpu_custom_call.1
$region0: #{tpu_custom_call.1}
  #allocation0 [shape = 'u32[]', space=smem, size = 0x4, offset = 0x4, fixed_abs, tag = 'smem constant byte address 0x4 - core index']
  #allocation1 [shape = 'u32[144,128]{1,0:T(1,128)}', space=vmem, size = 0x12000, scoped, tag = 'internal scratch']
  %s0 = inlined_call_operand.hbm [shape: f32[16,128], index: 0, kind: input, shape index: {}]
  %s1 = inlined_call_operand.hbm [shape: f32[16,128], index: 1, kind: output, shape index: {}]
  %s2 = sld [smem:[#allocation0]]
  $region18: #{tpu_custom_call.1} parent=0
    _
  %s4 = ssub.s32 1, %s2
  %s5 = scalar_select 0, %s4, %s2
  $region1: #{tpu_custom_call.1} parent=0
    #allocation2 [shape = 'u8[8192]{0}', space=vmem, size = 0x2000, scoped, tag = 'input window, operand 0, single buffered']
    #allocation3 [shape = 's32[1]{0}', space=sflag, size = 0x4, scoped, tag = 'scoped memory for tpu_custom_call.1']
    #allocation4 [shape = 's32[1]{0}', space=sflag, size = 0x4, scoped, tag = 'scoped memory for tpu_custom_call.1']
    #allocation5 [shape = 'u8[8192]{0}', space=vmem, size = 0x2000, scoped, tag = 'output window, operand 0, single buffered']
    %6 = vsyncpa [#allocation3], 0
    %7 = vsyncpa [#allocation4], 0
    // Predicated region
    $region2: #{tpu_custom_call.1} parent=1 // pred_check
      _
    $region3: #{tpu_custom_call.1} parent=1 // pred_check_branch
      %9 = sbr.rel (0) target = $region5
    $region4: #{tpu_custom_call.1} parent=1 // pred_region
      %s11 = ssub.s32 256, 256
      %12 = vsyncadd [#allocation3], %s11
      %s13 = sshll.u32 [#allocation2], 4
      %s14 = int_to_ptr.vmem [resolvable:$true] %s13
      %19 = dma.hbm_to_vmem [thread:$0]  %s0, 256, %s14, [#allocation3], 128, 128, 8
    $region5: #{tpu_custom_call.1} parent=1 // pred_fallthru
      _
    // Predicated region
    $region6: #{tpu_custom_call.1} parent=1 // pred_check
      _
    $region7: #{tpu_custom_call.1} parent=1 // pred_check_branch
      %21 = sbr.rel (0) target = $region9
    $region8: #{tpu_custom_call.1} parent=1 // pred_region
      %22 = dma.done [#allocation3], 256
    $region9: #{tpu_custom_call.1} parent=1 // pred_fallthru
      _
    %v23 = vld [vmem:[#allocation2] sm:$0xff]
    %v24 = vld [vmem:[#allocation2 + $0x8] sm:$0xff]
    %v25 = vlaneseq
    %v26 = vand.u32 %v25, 127
    %v27 = vand.u32 %v26, 15
    %vm28 = vcmp.lt.s32.totalorder %v27, 16
    %v29 = vmul.f32 %v23, 0.5
    %v30 = vmul.f32 %v24, 0.5
    %v31 = vsel %vm28, 1, 0
    %vm32 = vcmp.eq.s32.totalorder %v31, 1
    %v33 = vsel %vm32, %v29, -inf
    %v34 = vsel %vm32, %v30, -inf
    %v35 = vand.u32 %v27, 1
    %vm36 = vcmp.eq.s32.totalorder %v35, 0
    %37 = vrot.lane.b32.xlu0 %v33, 127
    %v38 = vpop.permute.xlu0 %37
    %39 = vrot.lane.b32.xlu0 %v34, 127
    %v40 = vpop.permute.xlu0 %39
    %41 = vrot.lane.b32.xlu0 %v33, 1
    %v42 = vpop.permute.xlu0 %41
    %43 = vrot.lane.b32.xlu0 %v34, 1
    %v44 = vpop.permute.xlu0 %43
    %v45 = vsel %vm36, 1, 0
    %vm46 = vcmp.eq.s32.totalorder %v45, 1
    %v47 = vsel %vm46, %v38, %v42
    %v48 = vsel %vm46, %v40, %v44
    %v49 = vand.u32 %v27, 2
    %vm50 = vcmp.eq.s32.totalorder %v49, 0
    %vm51 = vmxor %vm50, %vm36
    %v52 = vmin.f32 %v33, %v47
    %v53 = vmin.f32 %v34, %v48
    %v54 = vmax.f32 %v33, %v47
    %v55 = vmax.f32 %v34, %v48
    %v56 = vsel %vm51, 1, 0
    %vm57 = vcmp.eq.s32.totalorder %v56, 1
    %v58 = vsel %vm57, %v52, %v54
    %v59 = vsel %vm57, %v53, %v55
    %60 = vrot.lane.b32.xlu0 %v58, 126
    %v61 = vpop.permute.xlu0 %60
    %62 = vrot.lane.b32.xlu0 %v59, 126
    %v63 = vpop.permute.xlu0 %62
    %64 = vrot.lane.b32.xlu0 %v58, 2
    %v65 = vpop.permute.xlu0 %64
    %66 = vrot.lane.b32.xlu0 %v59, 2
    %v67 = vpop.permute.xlu0 %66
    %v68 = vsel %vm50, 1, 0
    %vm69 = vcmp.eq.s32.totalorder %v68, 1
    %v70 = vsel %vm69, %v61, %v65
    %v71 = vsel %vm69, %v63, %v67
    %v72 = vand.u32 %v27, 4
    %vm73 = vcmp.eq.s32.totalorder %v72, 0
    %vm74 = vmxor %vm73, %vm50
    %v75 = vmin.f32 %v58, %v70
    %v76 = vmin.f32 %v59, %v71
    %v77 = vmax.f32 %v58, %v70
    %v78 = vmax.f32 %v59, %v71
    %v79 = vsel %vm74, 1, 0
    %vm80 = vcmp.eq.s32.totalorder %v79, 1
    %v81 = vsel %vm80, %v75, %v77
    %v82 = vsel %vm80, %v76, %v78
    %83 = vrot.lane.b32.xlu0 %v81, 127
    %v84 = vpop.permute.xlu0 %83
    %85 = vrot.lane.b32.xlu0 %v82, 127
    %v86 = vpop.permute.xlu0 %85
    %87 = vrot.lane.b32.xlu0 %v81, 1
    %v88 = vpop.permute.xlu0 %87
    %89 = vrot.lane.b32.xlu0 %v82, 1
    %v90 = vpop.permute.xlu0 %89
    %v91 = vsel %vm46, %v84, %v88
    %v92 = vsel %vm46, %v86, %v90
    %vm93 = vmxor %vm73, %vm36
    %v94 = vmin.f32 %v81, %v91
    %v95 = vmin.f32 %v82, %v92
    %v96 = vmax.f32 %v81, %v91
    %v97 = vmax.f32 %v82, %v92
    %v98 = vsel %vm93, 1, 0
    %vm99 = vcmp.eq.s32.totalorder %v98, 1
    %v100 = vsel %vm99, %v94, %v96
    %v101 = vsel %vm99, %v95, %v97
    %102 = vrot.lane.b32.xlu0 %v100, 124
    %v103 = vpop.permute.xlu0 %102
    %104 = vrot.lane.b32.xlu0 %v101, 124
    %v105 = vpop.permute.xlu0 %104
    %106 = vrot.lane.b32.xlu0 %v100, 4
    %v107 = vpop.permute.xlu0 %106
    %108 = vrot.lane.b32.xlu0 %v101, 4
    %v109 = vpop.permute.xlu0 %108
    %v110 = vsel %vm73, 1, 0
    %vm111 = vcmp.eq.s32.totalorder %v110, 1
    %v112 = vsel %vm111, %v103, %v107
    %v113 = vsel %vm111, %v105, %v109
    %v114 = vand.u32 %v27, 8
    %vm115 = vcmp.eq.s32.totalorder %v114, 0
    %vm116 = vmxor %vm115, %vm73
    %v117 = vmin.f32 %v100, %v112
    %v118 = vmin.f32 %v101, %v113
    %v119 = vmax.f32 %v100, %v112
    %v120 = vmax.f32 %v101, %v113
    %v121 = vsel %vm116, 1, 0
    %vm122 = vcmp.eq.s32.totalorder %v121, 1
    %v123 = vsel %vm122, %v117, %v119
    %v124 = vsel %vm122, %v118, %v120
    %125 = vrot.lane.b32.xlu0 %v123, 126
    %v126 = vpop.permute.xlu0 %125
    %127 = vrot.lane.b32.xlu0 %v124, 126
    %v128 = vpop.permute.xlu0 %127
    %129 = vrot.lane.b32.xlu0 %v123, 2
    %v130 = vpop.permute.xlu0 %129
    %131 = vrot.lane.b32.xlu0 %v124, 2
    %v132 = vpop.permute.xlu0 %131
    %v133 = vsel %vm69, %v126, %v130
    %v134 = vsel %vm69, %v128, %v132
    %vm135 = vmxor %vm115, %vm50
    %v136 = vmin.f32 %v123, %v133
    %v137 = vmin.f32 %v124, %v134
    %v138 = vmax.f32 %v123, %v133
    %v139 = vmax.f32 %v124, %v134
    %v140 = vsel %vm135, 1, 0
    %vm141 = vcmp.eq.s32.totalorder %v140, 1
    %v142 = vsel %vm141, %v136, %v138
    %v143 = vsel %vm141, %v137, %v139
    %144 = vrot.lane.b32.xlu0 %v142, 127
    %v145 = vpop.permute.xlu0 %144
    %146 = vrot.lane.b32.xlu0 %v143, 127
    %v147 = vpop.permute.xlu0 %146
    %148 = vrot.lane.b32.xlu0 %v142, 1
    %v149 = vpop.permute.xlu0 %148
    %150 = vrot.lane.b32.xlu0 %v143, 1
    %v151 = vpop.permute.xlu0 %150
    %v152 = vsel %vm46, %v145, %v149
    %v153 = vsel %vm46, %v147, %v151
    %vm154 = vmxor %vm115, %vm36
    %v155 = vmin.f32 %v142, %v152
    %v156 = vmin.f32 %v143, %v153
    %v157 = vmax.f32 %v142, %v152
    %v158 = vmax.f32 %v143, %v153
    %v159 = vsel %vm154, 1, 0
    %vm160 = vcmp.eq.s32.totalorder %v159, 1
    %v161 = vsel %vm160, %v155, %v157
    %v162 = vsel %vm160, %v156, %v158
    %163 = vrot.lane.b32.xlu0 %v161, 120
    %v164 = vpop.permute.xlu0 %163
    %165 = vrot.lane.b32.xlu0 %v162, 120
    %v166 = vpop.permute.xlu0 %165
    %167 = vrot.lane.b32.xlu0 %v161, 8
    %v168 = vpop.permute.xlu0 %167
    %169 = vrot.lane.b32.xlu0 %v162, 8
    %v170 = vpop.permute.xlu0 %169
    %v171 = vsel %vm115, 1, 0
    %vm172 = vcmp.eq.s32.totalorder %v171, 1
    %v173 = vsel %vm172, %v164, %v168
    %v174 = vsel %vm172, %v166, %v170
    %v175 = vand.u32 %v27, 16
    %vm176 = vcmp.eq.s32.totalorder %v175, 0
    %vm177 = vmxor %vm176, %vm115
    %v178 = vmin.f32 %v161, %v173
    %v179 = vmin.f32 %v162, %v174
    %v180 = vmax.f32 %v161, %v173
    %v181 = vmax.f32 %v162, %v174
    %v182 = vsel %vm177, 1, 0
    %vm183 = vcmp.eq.s32.totalorder %v182, 1
    %v184 = vsel %vm183, %v178, %v180
    %v185 = vsel %vm183, %v179, %v181
    %186 = vrot.lane.b32.xlu0 %v184, 124
    %v187 = vpop.permute.xlu0 %186
    %188 = vrot.lane.b32.xlu0 %v185, 124
    %v189 = vpop.permute.xlu0 %188
    %190 = vrot.lane.b32.xlu0 %v184, 4
    %v191 = vpop.permute.xlu0 %190
    %192 = vrot.lane.b32.xlu0 %v185, 4
    %v193 = vpop.permute.xlu0 %192
    %v194 = vsel %vm111, %v187, %v191
    %v195 = vsel %vm111, %v189, %v193
    %vm196 = vmxor %vm176, %vm73
    %v197 = vmin.f32 %v184, %v194
    %v198 = vmin.f32 %v185, %v195
    %v199 = vmax.f32 %v184, %v194
    %v200 = vmax.f32 %v185, %v195
    %v201 = vsel %vm196, 1, 0
    %vm202 = vcmp.eq.s32.totalorder %v201, 1
    %v203 = vsel %vm202, %v197, %v199
    %v204 = vsel %vm202, %v198, %v200
    %205 = vrot.lane.b32.xlu0 %v203, 126
    %v206 = vpop.permute.xlu0 %205
    %207 = vrot.lane.b32.xlu0 %v204, 126
    %v208 = vpop.permute.xlu0 %207
    %209 = vrot.lane.b32.xlu0 %v203, 2
    %v210 = vpop.permute.xlu0 %209
    %211 = vrot.lane.b32.xlu0 %v204, 2
    %v212 = vpop.permute.xlu0 %211
    %v213 = vsel %vm69, %v206, %v210
    %v214 = vsel %vm69, %v208, %v212
    %vm215 = vmxor %vm176, %vm50
    %v216 = vmin.f32 %v203, %v213
    %v217 = vmin.f32 %v204, %v214
    %v218 = vmax.f32 %v203, %v213
    %v219 = vmax.f32 %v204, %v214
    %v220 = vsel %vm215, 1, 0
    %vm221 = vcmp.eq.s32.totalorder %v220, 1
    %v222 = vsel %vm221, %v216, %v218
    %v223 = vsel %vm221, %v217, %v219
    %224 = vrot.lane.b32.xlu0 %v222, 127
    %v225 = vpop.permute.xlu0 %224
    %226 = vrot.lane.b32.xlu0 %v223, 127
    %v227 = vpop.permute.xlu0 %226
    %228 = vrot.lane.b32.xlu0 %v222, 1
    %v229 = vpop.permute.xlu0 %228
    %230 = vrot.lane.b32.xlu0 %v223, 1
    %v231 = vpop.permute.xlu0 %230
    %v232 = vsel %vm46, %v225, %v229
    %v233 = vsel %vm46, %v227, %v231
    %vm234 = vmxor %vm176, %vm36
    %v235 = vmin.f32 %v222, %v232
    %v236 = vmin.f32 %v223, %v233
    %v237 = vmax.f32 %v222, %v232
    %v238 = vmax.f32 %v223, %v233
    %v239 = vsel %vm234, 1, 0
    %vm240 = vcmp.eq.s32.totalorder %v239, 1
    %v241 = vsel %vm240, %v235, %v237
    %v242 = vsel %vm240, %v236, %v238
    %vm243 = vcmp.ge.s32.totalorder %v27, 1
    %244 = vrot.lane.b32.xlu0 %v241, 1
    %v245 = vpop.permute.xlu0 %244
    %246 = vrot.lane.b32.xlu0 %v242, 1
    %v247 = vpop.permute.xlu0 %246
    %v248 = vsel %vm243, 1, 0
    %vm249 = vcmp.eq.s32.totalorder %v248, 1
    %v250 = vsel %vm249, %v245, 0.0
    %v251 = vsel %vm249, %v247, 0.0
    %v252 = vadd.f32 %v241, %v250
    %v253 = vadd.f32 %v242, %v251
    %vm254 = vcmp.ge.s32.totalorder %v27, 2
    %255 = vrot.lane.b32.xlu0 %v252, 2
    %v256 = vpop.permute.xlu0 %255
    %257 = vrot.lane.b32.xlu0 %v253, 2
    %v258 = vpop.permute.xlu0 %257
    %v259 = vsel %vm254, 1, 0
    %vm260 = vcmp.eq.s32.totalorder %v259, 1
    %v261 = vsel %vm260, %v256, 0.0
    %v262 = vsel %vm260, %v258, 0.0
    %v263 = vadd.f32 %v252, %v261
    %v264 = vadd.f32 %v253, %v262
    %vm265 = vcmp.ge.s32.totalorder %v27, 4
    %266 = vrot.lane.b32.xlu0 %v263, 4
    %v267 = vpop.permute.xlu0 %266
    %268 = vrot.lane.b32.xlu0 %v264, 4
    %v269 = vpop.permute.xlu0 %268
    %v270 = vsel %vm265, 1, 0
    %vm271 = vcmp.eq.s32.totalorder %v270, 1
    %v272 = vsel %vm271, %v267, 0.0
    %v273 = vsel %vm271, %v269, 0.0
    %v274 = vadd.f32 %v263, %v272
    %v275 = vadd.f32 %v264, %v273
    %vm276 = vcmp.ge.s32.totalorder %v27, 8
    %277 = vrot.lane.b32.xlu0 %v274, 8
    %v278 = vpop.permute.xlu0 %277
    %279 = vrot.lane.b32.xlu0 %v275, 8
    %v280 = vpop.permute.xlu0 %279
    %v281 = vsel %vm276, 1, 0
    %vm282 = vcmp.eq.s32.totalorder %v281, 1
    %v283 = vsel %vm282, %v278, 0.0
    %v284 = vsel %vm282, %v280, 0.0
    %v285 = vadd.f32 %v274, %v283
    %v286 = vadd.f32 %v275, %v284
    %v287 = vmul.f32 %v241, %v241
    %v288 = vmul.f32 %v242, %v242
    %289 = vrot.lane.b32.xlu0 %v287, 1
    %v290 = vpop.permute.xlu0 %289
    %291 = vrot.lane.b32.xlu0 %v288, 1
    %v292 = vpop.permute.xlu0 %291
    %v293 = vsel %vm249, %v290, 0.0
    %v294 = vsel %vm249, %v292, 0.0
    %v295 = vadd.f32 %v287, %v293
    %v296 = vadd.f32 %v288, %v294
    %297 = vrot.lane.b32.xlu0 %v295, 2
    %v298 = vpop.permute.xlu0 %297
    %299 = vrot.lane.b32.xlu0 %v296, 2
    %v300 = vpop.permute.xlu0 %299
    %v301 = vsel %vm260, %v298, 0.0
    %v302 = vsel %vm260, %v300, 0.0
    %v303 = vadd.f32 %v295, %v301
    %v304 = vadd.f32 %v296, %v302
    %305 = vrot.lane.b32.xlu0 %v303, 4
    %v306 = vpop.permute.xlu0 %305
    %307 = vrot.lane.b32.xlu0 %v304, 4
    %v308 = vpop.permute.xlu0 %307
    %v309 = vsel %vm271, %v306, 0.0
    %v310 = vsel %vm271, %v308, 0.0
    %v311 = vadd.f32 %v303, %v309
    %v312 = vadd.f32 %v304, %v310
    %313 = vrot.lane.b32.xlu0 %v311, 8
    %v314 = vpop.permute.xlu0 %313
    %315 = vrot.lane.b32.xlu0 %v312, 8
    %v316 = vpop.permute.xlu0 %315
    %v317 = vsel %vm282, %v314, 0.0
    %v318 = vsel %vm282, %v316, 0.0
    %v319 = vadd.f32 %v311, %v317
    %v320 = vadd.f32 %v312, %v318
    %v321 = vadd.s32 %v27, 1
    %v322 = vcvt.s32.f32 %v321
    %v323 = vrcp.pop %v322
    %v324 = vmul.f32 1.0, %v323
    %v325 = vmul.f32 %v285, %v324
    %v326 = vmul.f32 %v286, %v324
    %v327 = vmul.f32 %v319, %v324
    %v328 = vmul.f32 %v320, %v324
    %v329 = vmul.f32 %v325, %v325
    %v330 = vmul.f32 %v326, %v326
    %v331 = vsub.f32 %v327, %v329
    %v332 = vsub.f32 %v328, %v330
    %v333 = vmul.f32 %v322, %v331
    %v334 = vmul.f32 %v322, %v332
    %v335 = vsub.f32 1.0, %v333
    %v336 = vsub.f32 1.0, %v334
    %v337 = vmul.f32 %v335, %v324
    %v338 = vmul.f32 %v336, %v324
    %v339 = vrsqrt.pop %v337
    %v340 = vmul.f32 %v337, %v339
    %vm341 = vcmp.eq.f32.partialorder %v337, inf
    %v342 = vsel %vm341, %v337, %v340
    %vm343 = vcmp.eq.f32.partialorder %v337, 0.0
    %v344 = vand.u32 %v337, 2147483648
    %v345 = vsel %vm343, %v344, %v342
    %v346 = vrsqrt.pop %v338
    %v347 = vmul.f32 %v338, %v346
    %vm348 = vcmp.eq.f32.partialorder %v338, inf
    %v349 = vsel %vm348, %v338, %v347
    %vm350 = vcmp.eq.f32.partialorder %v338, 0.0
    %v351 = vand.u32 %v338, 2147483648
    %v352 = vsel %vm350, %v351, %v349
    %v353 = vsub.f32 %v325, %v345
    %v354 = vsub.f32 %v326, %v352
    %vm355 = vcmp.le.f32.partialorder %v353, %v241
    %vm356 = vcmp.le.f32.partialorder %v354, %v242
    %vm357 = vmand %vm355, %vm32
    %vm358 = vmand %vm356, %vm32
    %v359 = vsel %vm357, 1.0, 0.0
    %v360 = vsel %vm358, 1.0, 0.0
    %361 = vrot.lane.b32.xlu0 %v359, 127
    %v362 = vpop.permute.xlu0 %361
    %363 = vrot.lane.b32.xlu0 %v360, 127
    %v364 = vpop.permute.xlu0 %363
    %365 = vrot.lane.b32.xlu0 %v359, 1
    %v366 = vpop.permute.xlu0 %365
    %367 = vrot.lane.b32.xlu0 %v360, 1
    %v368 = vpop.permute.xlu0 %367
    %v369 = vsel %vm46, %v362, %v366
    %v370 = vsel %vm46, %v364, %v368
    %v371 = vadd.f32 %v359, %v369
    %v372 = vadd.f32 %v360, %v370
    %373 = vrot.lane.b32.xlu0 %v371, 126
    %v374 = vpop.permute.xlu0 %373
    %375 = vrot.lane.b32.xlu0 %v372, 126
    %v376 = vpop.permute.xlu0 %375
    %377 = vrot.lane.b32.xlu0 %v371, 2
    %v378 = vpop.permute.xlu0 %377
    %379 = vrot.lane.b32.xlu0 %v372, 2
    %v380 = vpop.permute.xlu0 %379
    %v381 = vsel %vm69, %v374, %v378
    %v382 = vsel %vm69, %v376, %v380
    %v383 = vadd.f32 %v371, %v381
    %v384 = vadd.f32 %v372, %v382
    %385 = vrot.lane.b32.xlu0 %v383, 124
    %v386 = vpop.permute.xlu0 %385
    %387 = vrot.lane.b32.xlu0 %v384, 124
    %v388 = vpop.permute.xlu0 %387
    %389 = vrot.lane.b32.xlu0 %v383, 4
    %v390 = vpop.permute.xlu0 %389
    %391 = vrot.lane.b32.xlu0 %v384, 4
    %v392 = vpop.permute.xlu0 %391
    %v393 = vsel %vm111, %v386, %v390
    %v394 = vsel %vm111, %v388, %v392
    %v395 = vadd.f32 %v383, %v393
    %v396 = vadd.f32 %v384, %v394
    %397 = vrot.lane.b32.xlu0 %v395, 120
    %v398 = vpop.permute.xlu0 %397
    %399 = vrot.lane.b32.xlu0 %v396, 120
    %v400 = vpop.permute.xlu0 %399
    %401 = vrot.lane.b32.xlu0 %v395, 8
    %v402 = vpop.permute.xlu0 %401
    %403 = vrot.lane.b32.xlu0 %v396, 8
    %v404 = vpop.permute.xlu0 %403
    %v405 = vsel %vm172, %v398, %v402
    %v406 = vsel %vm172, %v400, %v404
    %v407 = vadd.f32 %v395, %v405
    %v408 = vadd.f32 %v396, %v406
    %vm409 = vcmp.eq.f32.partialorder %v322, %v407
    %vm410 = vcmp.eq.f32.partialorder %v322, %v408
    %v411 = vsel %vm409, %v353, 0.0
    %v412 = vsel %vm410, %v354, 0.0
    %413 = vrot.lane.b32.xlu0 %v411, 127
    %v414 = vpop.permute.xlu0 %413
    %415 = vrot.lane.b32.xlu0 %v412, 127
    %v416 = vpop.permute.xlu0 %415
    %417 = vrot.lane.b32.xlu0 %v411, 1
    %v418 = vpop.permute.xlu0 %417
    %419 = vrot.lane.b32.xlu0 %v412, 1
    %v420 = vpop.permute.xlu0 %419
    %v421 = vsel %vm46, %v414, %v418
    %v422 = vsel %vm46, %v416, %v420
    %v423 = vadd.f32 %v411, %v421
    %v424 = vadd.f32 %v412, %v422
    %425 = vrot.lane.b32.xlu0 %v423, 126
    %v426 = vpop.permute.xlu0 %425
    %427 = vrot.lane.b32.xlu0 %v424, 126
    %v428 = vpop.permute.xlu0 %427
    %429 = vrot.lane.b32.xlu0 %v423, 2
    %v430 = vpop.permute.xlu0 %429
    %431 = vrot.lane.b32.xlu0 %v424, 2
    %v432 = vpop.permute.xlu0 %431
    %v433 = vsel %vm69, %v426, %v430
    %v434 = vsel %vm69, %v428, %v432
    %v435 = vadd.f32 %v423, %v433
    %v436 = vadd.f32 %v424, %v434
    %437 = vrot.lane.b32.xlu0 %v435, 124
    %v438 = vpop.permute.xlu0 %437
    %439 = vrot.lane.b32.xlu0 %v436, 124
    %v440 = vpop.permute.xlu0 %439
    %441 = vrot.lane.b32.xlu0 %v435, 4
    %v442 = vpop.permute.xlu0 %441
    %443 = vrot.lane.b32.xlu0 %v436, 4
    %v444 = vpop.permute.xlu0 %443
    %v445 = vsel %vm111, %v438, %v442
    %v446 = vsel %vm111, %v440, %v444
    %v447 = vadd.f32 %v435, %v445
    %v448 = vadd.f32 %v436, %v446
    %449 = vrot.lane.b32.xlu0 %v447, 120
    %v450 = vpop.permute.xlu0 %449
    %451 = vrot.lane.b32.xlu0 %v448, 120
    %v452 = vpop.permute.xlu0 %451
    %453 = vrot.lane.b32.xlu0 %v447, 8
    %v454 = vpop.permute.xlu0 %453
    %455 = vrot.lane.b32.xlu0 %v448, 8
    %v456 = vpop.permute.xlu0 %455
    %v457 = vsel %vm172, %v450, %v454
    %v458 = vsel %vm172, %v452, %v456
    %v459 = vadd.f32 %v447, %v457
    %v460 = vadd.f32 %v448, %v458
    %v461 = vsub.f32 %v241, %v459
    %v462 = vsub.f32 %v242, %v460
    %v463 = vmax.f32 %v461, 0.0
    %v464 = vmax.f32 %v462, 0.0
    %v465 = vmul.f32 %v463, %v463
    %v466 = vmul.f32 %v464, %v464
    %467 = vst [vmem:[#allocation5] sm:$0xff] %v465
    %468 = vst [vmem:[#allocation5 + $0x8] sm:$0xff] %v466
    // Predicated region
    $region10: #{tpu_custom_call.1} parent=1 // pred_check
      _
    $region11: #{tpu_custom_call.1} parent=1 // pred_check_branch
      %470 = sbr.rel (0) target = $region13
    $region12: #{tpu_custom_call.1} parent=1 // pred_region
      %s472 = ssub.s32 256, 256
      %473 = vsyncadd [#allocation4], %s472
      %s474 = sshll.u32 [#allocation5], 4
      %s475 = int_to_ptr.vmem [resolvable:$true] %s474
      %480 = dma.vmem_to_hbm [thread:$0]  %s475, 256, %s1, [#allocation4], 128, 128, 8
    $region13: #{tpu_custom_call.1} parent=1 // pred_fallthru
      _
    // Predicated region
    $region14: #{tpu_custom_call.1} parent=1 // pred_check
      _
    $region15: #{tpu_custom_call.1} parent=1 // pred_check_branch
      %482 = sbr.rel (0) target = $region17
    $region16: #{tpu_custom_call.1} parent=1 // pred_region
      %483 = dma.done [#allocation4], 256
    $region17: #{tpu_custom_call.1} parent=1 // pred_fallthru
      _
    %484 = vsyncpa [#allocation3], 1
    %485 = vsyncpa [#allocation4], 1

</llo_original>
